<compile_context>
chip_gen: v6e
topology: v6e:2x2x1
jax: 0.10.0
libtpu: 0.0.40
codegen_flags: <defaults>
</compile_context>

<pallas_src>
import functools

import jax
import jax.numpy as jnp
from jax.experimental import pallas as pl
from jax.experimental.pallas import tpu as pltpu

EPS = 1e-8
DEFAULT_ENTROPY_WEIGHT = 2.0  # SCANLoss default


def _scan_loss_kernel(anchors_ref, neighbors_ref, out_ref, psum_ref, lsum_ref,
                      *, batch, row_tile, entropy_weight):
    pid = pl.program_id(0)
    last = pl.num_programs(0) - 1

    @pl.when(pid == 0)
    def _init():
        psum_ref[...] = jnp.zeros_like(psum_ref)
        lsum_ref[...] = jnp.zeros_like(lsum_ref)

    a = anchors_ref[...].astype(jnp.float32)     # [TB, n] logits
    nb = neighbors_ref[...].astype(jnp.float32)  # [TB, n] logits

    # Numerically stable exponentials over the class (lane) axis.
    a_max = jnp.max(a, axis=1, keepdims=True)
    a_exp = jnp.exp(a - a_max)
    a_sum = jnp.sum(a_exp, axis=1, keepdims=True)        # [TB, 1]

    n_max = jnp.max(nb, axis=1, keepdims=True)
    n_exp = jnp.exp(nb - n_max)
    n_sum = jnp.sum(n_exp, axis=1, keepdims=True)        # [TB, 1]

    # Anchor probabilities: one reciprocal per row + broadcast multiply
    # (no per-element divide).  Exact reciprocal keeps 1e-5-level accuracy.
    a_prob = a_exp * pl.reciprocal(a_sum)                 # [TB, n]

    # Per-row similarity sim = sum(a_prob * n_prob); computed algebraically so
    # neighbor probabilities are never materialized:
    #   log(sim) = log(sum(a_exp*n_exp)) - log(sum a_exp) - log(sum n_exp)
    dot = jnp.sum(a_exp * n_exp, axis=1, keepdims=True)   # [TB, 1]
    log_sim = jnp.log(dot) - jnp.log(a_sum) - jnp.log(n_sum)
    # BCE against all-ones target; torch clamps log at -100.
    neg_log = -jnp.maximum(log_sim, -100.0)                # [TB, 1]

    @pl.when(pid != last)
    def _accumulate_fast():
        # Only the final tile can contain wrapper-added padding rows, so all
        # earlier tiles skip the mask entirely.
        lsum_ref[...] += jnp.sum(neg_log, axis=0, keepdims=True)
        psum_ref[...] += jnp.sum(a_prob, axis=0, keepdims=True)

    @pl.when(pid == last)
    def _accumulate_masked_and_finalize():
        row = jax.lax.broadcasted_iota(jnp.int32, (row_tile, 1), 0)
        valid = (pid * row_tile + row) < batch             # [TB, 1] bool

        lsum = lsum_ref[...] + jnp.sum(
            jnp.where(valid, neg_log, 0.0), axis=0, keepdims=True)   # (1, 1)
        psum = psum_ref[...] + jnp.sum(
            jnp.where(valid, a_prob, 0.0), axis=0, keepdims=True)    # (1, n)

        inv_b = 1.0 / float(batch)
        consistency = lsum * inv_b                          # (1, 1)
        mean_prob = psum * inv_b                            # (1, n)
        mp = jnp.maximum(mean_prob, EPS)
        ent = -jnp.sum(mp * jnp.log(mp), axis=1, keepdims=True)      # (1, 1)
        total = consistency - entropy_weight * ent                   # (1, 1)

        lane = jax.lax.broadcasted_iota(jnp.int32, out_ref.shape, 1)
        out_ref[...] = jnp.where(lane == 0, total,
                       jnp.where(lane == 1, consistency,
                       jnp.where(lane == 2, ent, 0.0)))


def _round_up(x, m):
    return (x + m - 1) // m * m


def _default_vmem_limit_bytes():
    """~Half of physical VMEM (v7x-safe fallback 64 MiB), capped at 48 MiB."""
    cap = None
    try:
        info = pltpu.get_tpu_info()
        cap = getattr(info, "vmem_capacity_bytes", None)
    except Exception:
        cap = None
    if not cap:
        cap = 64 * 1024 * 1024   # assume the smallest (v7x) if unknown
    return int(min(cap // 2, 48 * 1024 * 1024))


def scan_loss(anchors, neighbors, *, entropy_weight=DEFAULT_ENTROPY_WEIGHT,
              row_tile=None, vmem_limit_bytes=None):
    """anchors, neighbors: [b, num_classes] logits -> (total, consistency, entropy)."""
    assert anchors.shape == neighbors.shape, (anchors.shape, neighbors.shape)
    b, n = anchors.shape
    itemsize = jnp.dtype(anchors.dtype).itemsize
    n_lanes = _round_up(max(n, 1), 128)   # VMEM blocks are lane-padded to 128

    if vmem_limit_bytes is None:
        vmem_limit_bytes = _default_vmem_limit_bytes()
    vmem_limit_bytes = int(vmem_limit_bytes)

    if row_tile is None:
        # 2 inputs x 2 pipeline buffers per block must stay within ~2/3 of the
        # scoped-VMEM budget (accumulators + compiler temps take the rest).
        per_block_bytes = max(vmem_limit_bytes // 6, 1 << 20)
        bytes_per_row = n_lanes * itemsize
        row_tile = per_block_bytes // bytes_per_row
    # 16-row alignment (covers bf16 sublane packing as well as f32's 8).
    row_tile = min(int(row_tile), _round_up(b, 16))
    row_tile = max(16, (int(row_tile) // 16) * 16)

    b_pad = _round_up(b, row_tile)
    if b_pad != b:
        pad = ((0, b_pad - b), (0, 0))
        anchors = jnp.pad(anchors, pad)
        neighbors = jnp.pad(neighbors, pad)

    grid = (b_pad // row_tile,)

    kernel = functools.partial(
        _scan_loss_kernel, batch=b, row_tile=row_tile,
        entropy_weight=float(entropy_weight))

    out = pl.pallas_call(
        kernel,
        out_shape=jax.ShapeDtypeStruct((1, 128), jnp.float32),
        grid_spec=pltpu.PrefetchScalarGridSpec(
            num_scalar_prefetch=0,
            grid=grid,
            in_specs=[
                pl.BlockSpec((row_tile, n), lambda i: (i, 0)),
                pl.BlockSpec((row_tile, n), lambda i: (i, 0)),
            ],
            out_specs=pl.BlockSpec((1, 128), lambda i: (0, 0)),
            scratch_shapes=[
                pltpu.VMEM((1, n), jnp.float32),   # running sum of anchor probs
                pltpu.VMEM((1, 1), jnp.float32),   # running sum of -log(sim)
            ],
        ),
        compiler_params=pltpu.CompilerParams(
            dimension_semantics=("arbitrary",),    # reduction axis (accumulators)
            vmem_limit_bytes=vmem_limit_bytes,
        ),
        cost_estimate=pl.CostEstimate(
            flops=int(12 * b * n),
            transcendentals=int(2 * b * n + 6 * b),
            bytes_accessed=int(2 * b_pad * n * itemsize + 128 * 4),
        ),
    )(anchors, neighbors)

    return out[0, 0], out[0, 1], out[0, 2]


def _reference(anchors, neighbors, entropy_weight=DEFAULT_ENTROPY_WEIGHT):
    a_prob = jax.nn.softmax(anchors.astype(jnp.float32), axis=1)
    n_prob = jax.nn.softmax(neighbors.astype(jnp.float32), axis=1)
    sim = jnp.sum(a_prob * n_prob, axis=1)
    consistency = -jnp.mean(jnp.maximum(jnp.log(sim), -100.0))
    mp = jnp.maximum(jnp.mean(a_prob, axis=0), EPS)
    ent = -jnp.sum(mp * jnp.log(mp))
    return consistency - entropy_weight * ent, consistency, ent


def _check(got, ref, atol=5e-5, rtol=1e-5):
    for g, r in zip(got, ref):
        assert jnp.allclose(g, r, atol=atol, rtol=rtol), (g, r)


if __name__ == "__main__":
    key = jax.random.PRNGKey(0)
    k1, k2, k3, k4, k5, k6 = jax.random.split(key, 6)

    # Case 1: small SCAN-like shape (single grid step, padded rows).
    b, num_classes = 8, 16
    anchors = jax.random.normal(k1, (b, num_classes), dtype=jnp.float32)
    neighbors = jax.random.normal(k2, (b, num_classes), dtype=jnp.float32)
    res1 = scan_loss(anchors, neighbors)
    jax.block_until_ready(res1)
    _check(res1, _reference(anchors, neighbors))

    # Case 2: exercises the batch-tiled grid, accumulators, the unmasked fast
    # path and padded-row masking on the final tile (b not a tile multiple).
    b2, n2 = 100, 10
    a2 = jax.random.normal(k3, (b2, n2), dtype=jnp.float32)
    nb2 = jax.random.normal(k4, (b2, n2), dtype=jnp.float32)
    res2 = scan_loss(a2, nb2, row_tile=32)
    jax.block_until_ready(res2)
    _check(res2, _reference(a2, nb2))

    # Case 3: bf16 logits fed directly (kernel upcasts to f32 internally).
    b3, n3 = 64, 20
    a3 = jax.random.normal(k5, (b3, n3), dtype=jnp.float32).astype(jnp.bfloat16)
    nb3 = jax.random.normal(k6, (b3, n3), dtype=jnp.float32).astype(jnp.bfloat16)
    res3 = scan_loss(a3, nb3)
    jax.block_until_ready(res3)
    _check(res3, _reference(a3, nb3), atol=1e-4)

    print("KERNEL_OK")
</pallas_src>

<mosaic_0001>
module attributes {stable_mosaic.version = 11 : i64} {
  func.func @_scan_loss_kernel(%arg0: i32, %arg1: memref<16x16xf32, #tpu.memory_space<vmem>>, %arg2: memref<16x16xf32, #tpu.memory_space<vmem>>, %arg3: memref<1x128xf32, #tpu.memory_space<vmem>>, %arg4: memref<1x16xf32, #tpu.memory_space<vmem>>, %arg5: memref<1x1xf32, #tpu.memory_space<vmem>>) attributes {dimension_semantics = [#tpu.dimension_semantics<arbitrary>], iteration_bounds = array<i64: 1>, scalar_prefetch = 0 : i64, scratch_operands = 2 : i64, tpu.core_type = #tpu.core_type<tc>, window_params = [{transform_indices = @transform_0, window_bounds = array<i64: 16, 16>}, {transform_indices = @transform_1, window_bounds = array<i64: 16, 16>}, {pipeline_mode = #tpu.pipeline_mode<synchronous>, transform_indices = @transform_2, window_bounds = array<i64: 1, 128>}]} {
    %c0_i32 = arith.constant 0 : i32
    %0 = arith.cmpi eq, %arg0, %c0_i32 : i32
    %1 = arith.extui %0 : i1 to i32
    %c0_i32_0 = arith.constant 0 : i32
    %2 = arith.cmpi ne, %1, %c0_i32_0 : i32
    scf.if %2 {
      %cst_14 = arith.constant 0.000000e+00 : f32
      %40 = vector.broadcast %cst_14 : f32 to vector<1x16xf32>
      %c0_15 = arith.constant 0 : index
      %c0_16 = arith.constant 0 : index
      %41 = vector.load %arg4[%c0_15, %c0_16] : memref<1x16xf32, #tpu.memory_space<vmem>>, vector<1x16xf32>
      tpu.vector_store %arg4[%c0_15, %c0_16], %40 {strides = array<i32>} : memref<1x16xf32, #tpu.memory_space<vmem>>, vector<1x16xf32>,
      %cst_17 = arith.constant 0.000000e+00 : f32
      %42 = vector.broadcast %cst_17 : f32 to vector<1x1xf32>
      %c0_18 = arith.constant 0 : index
      %c0_19 = arith.constant 0 : index
      %43 = vector.load %arg5[%c0_18, %c0_19] : memref<1x1xf32, #tpu.memory_space<vmem>>, vector<1x1xf32>
      tpu.vector_store %arg5[%c0_18, %c0_19], %42 {strides = array<i32>} : memref<1x1xf32, #tpu.memory_space<vmem>>, vector<1x1xf32>,
    } else {
    }
    %c0 = arith.constant 0 : index
    %c0_1 = arith.constant 0 : index
    %3 = vector.load %arg1[%c0, %c0_1] : memref<16x16xf32, #tpu.memory_space<vmem>>, vector<16x16xf32>
    %c0_2 = arith.constant 0 : index
    %c0_3 = arith.constant 0 : index
    %4 = vector.load %arg2[%c0_2, %c0_3] : memref<16x16xf32, #tpu.memory_space<vmem>>, vector<16x16xf32>
    %cst = arith.constant dense<0xFF800000> : vector<16xf32>
    %5 = vector.multi_reduction <maximumf>, %3, %cst [1] : vector<16x16xf32> to vector<16xf32>
    %6 = vector.shape_cast %5 : vector<16xf32> to vector<16x1xf32>
    %7 = vector.broadcast %6 : vector<16x1xf32> to vector<16x16xf32>
    %8 = arith.subf %3, %7 : vector<16x16xf32>
    %9 = math.exp %8 : vector<16x16xf32>
    %cst_4 = arith.constant dense<0.000000e+00> : vector<16xf32>
    %10 = vector.multi_reduction <add>, %9, %cst_4 [1] : vector<16x16xf32> to vector<16xf32>
    %11 = vector.shape_cast %10 : vector<16xf32> to vector<16x1xf32>
    %cst_5 = arith.constant dense<0xFF800000> : vector<16xf32>
    %12 = vector.multi_reduction <maximumf>, %4, %cst_5 [1] : vector<16x16xf32> to vector<16xf32>
    %13 = vector.shape_cast %12 : vector<16xf32> to vector<16x1xf32>
    %14 = vector.broadcast %13 : vector<16x1xf32> to vector<16x16xf32>
    %15 = arith.subf %4, %14 : vector<16x16xf32>
    %16 = math.exp %15 : vector<16x16xf32>
    %cst_6 = arith.constant dense<0.000000e+00> : vector<16xf32>
    %17 = vector.multi_reduction <add>, %16, %cst_6 [1] : vector<16x16xf32> to vector<16xf32>
    %18 = vector.shape_cast %17 : vector<16xf32> to vector<16x1xf32>
    %19 = tpu.reciprocal %11 : vector<16x1xf32> -> vector<16x1xf32>
    %20 = vector.broadcast %19 : vector<16x1xf32> to vector<16x16xf32>
    %21 = arith.mulf %9, %20 : vector<16x16xf32>
    %22 = arith.mulf %9, %16 : vector<16x16xf32>
    %cst_7 = arith.constant dense<0.000000e+00> : vector<16xf32>
    %23 = vector.multi_reduction <add>, %22, %cst_7 [1] : vector<16x16xf32> to vector<16xf32>
    %24 = vector.shape_cast %23 : vector<16xf32> to vector<16x1xf32>
    %25 = math.log %24 : vector<16x1xf32>
    %26 = math.log %11 : vector<16x1xf32>
    %27 = arith.subf %25, %26 : vector<16x1xf32>
    %28 = math.log %18 : vector<16x1xf32>
    %29 = arith.subf %27, %28 : vector<16x1xf32>
    %cst_8 = arith.constant -1.000000e+02 : f32
    %30 = vector.broadcast %cst_8 : f32 to vector<16x1xf32>
    %31 = arith.maximumf %29, %30 : vector<16x1xf32>
    %cst_9 = arith.constant 0.000000e+00 : f32
    %32 = vector.broadcast %cst_9 : f32 to vector<16x1xf32>
    %33 = arith.subf %32, %31 : vector<16x1xf32>
    %c0_i32_10 = arith.constant 0 : i32
    %34 = arith.cmpi ne, %arg0, %c0_i32_10 : i32
    %35 = arith.extui %34 : i1 to i32
    %c0_i32_11 = arith.constant 0 : i32
    %36 = arith.cmpi ne, %35, %c0_i32_11 : i32
    scf.if %36 {
      %c0_14 = arith.constant 0 : index
      %c0_15 = arith.constant 0 : index
      %40 = vector.load %arg5[%c0_14, %c0_15] : memref<1x1xf32, #tpu.memory_space<vmem>>, vector<1x1xf32>
      %cst_16 = arith.constant dense<0.000000e+00> : vector<1xf32>
      %41 = vector.multi_reduction <add>, %33, %cst_16 [0] : vector<16x1xf32> to vector<1xf32>
      %42 = vector.shape_cast %41 : vector<1xf32> to vector<1x1xf32>
      %43 = arith.addf %40, %42 : vector<1x1xf32>
      %c0_17 = arith.constant 0 : index
      %c0_18 = arith.constant 0 : index
      %44 = vector.load %arg5[%c0_17, %c0_18] : memref<1x1xf32, #tpu.memory_space<vmem>>, vector<1x1xf32>
      tpu.vector_store %arg5[%c0_17, %c0_18], %43 {strides = array<i32>} : memref<1x1xf32, #tpu.memory_space<vmem>>, vector<1x1xf32>,
      %c0_19 = arith.constant 0 : index
      %c0_20 = arith.constant 0 : index
      %45 = vector.load %arg4[%c0_19, %c0_20] : memref<1x16xf32, #tpu.memory_space<vmem>>, vector<1x16xf32>
      %cst_21 = arith.constant dense<0.000000e+00> : vector<16xf32>
      %46 = vector.multi_reduction <add>, %21, %cst_21 [0] : vector<16x16xf32> to vector<16xf32>
      %47 = vector.shape_cast %46 : vector<16xf32> to vector<1x16xf32>
      %48 = arith.addf %45, %47 : vector<1x16xf32>
      %c0_22 = arith.constant 0 : index
      %c0_23 = arith.constant 0 : index
      %49 = vector.load %arg4[%c0_22, %c0_23] : memref<1x16xf32, #tpu.memory_space<vmem>>, vector<1x16xf32>
      tpu.vector_store %arg4[%c0_22, %c0_23], %48 {strides = array<i32>} : memref<1x16xf32, #tpu.memory_space<vmem>>, vector<1x16xf32>,
    } else {
    }
    %c0_i32_12 = arith.constant 0 : i32
    %37 = arith.cmpi eq, %arg0, %c0_i32_12 : i32
    %38 = arith.extui %37 : i1 to i32
    %c0_i32_13 = arith.constant 0 : i32
    %39 = arith.cmpi ne, %38, %c0_i32_13 : i32
    scf.if %39 {
      %40 = tpu.iota {dimensions = array<i32: 0>} : vector<16x1xi32>
      %c16_i32 = arith.constant 16 : i32
      %41 = arith.muli %arg0, %c16_i32 : i32
      %42 = vector.broadcast %41 : i32 to vector<16x1xi32>
      %43 = arith.addi %42, %40 : vector<16x1xi32>
      %c8_i32 = arith.constant 8 : i32
      %44 = vector.broadcast %c8_i32 : i32 to vector<16x1xi32>
      %45 = arith.cmpi slt, %43, %44 : vector<16x1xi32>
      %c0_14 = arith.constant 0 : index
      %c0_15 = arith.constant 0 : index
      %46 = vector.load %arg5[%c0_14, %c0_15] : memref<1x1xf32, #tpu.memory_space<vmem>>, vector<1x1xf32>
      %cst_16 = arith.constant 0.000000e+00 : f32
      %47 = vector.broadcast %cst_16 : f32 to vector<16x1xf32>
      %48 = arith.select %45, %33, %47 : vector<16x1xi1>, vector<16x1xf32>
      %cst_17 = arith.constant dense<0.000000e+00> : vector<1xf32>
      %49 = vector.multi_reduction <add>, %48, %cst_17 [0] : vector<16x1xf32> to vector<1xf32>
      %50 = vector.shape_cast %49 : vector<1xf32> to vector<1x1xf32>
      %51 = arith.addf %46, %50 : vector<1x1xf32>
      %c0_18 = arith.constant 0 : index
      %c0_19 = arith.constant 0 : index
      %52 = vector.load %arg4[%c0_18, %c0_19] : memref<1x16xf32, #tpu.memory_space<vmem>>, vector<1x16xf32>
      %cst_20 = arith.constant 0.000000e+00 : f32
      %53 = vector.shape_cast %45 : vector<16x1xi1> to vector<16x1xi1>
      %54 = vector.broadcast %53 : vector<16x1xi1> to vector<16x16xi1>
      %55 = vector.broadcast %cst_20 : f32 to vector<16x16xf32>
      %56 = arith.select %54, %21, %55 : vector<16x16xi1>, vector<16x16xf32>
      %cst_21 = arith.constant dense<0.000000e+00> : vector<16xf32>
      %57 = vector.multi_reduction <add>, %56, %cst_21 [0] : vector<16x16xf32> to vector<16xf32>
      %58 = vector.shape_cast %57 : vector<16xf32> to vector<1x16xf32>
      %59 = arith.addf %52, %58 : vector<1x16xf32>
      %cst_22 = arith.constant 1.250000e-01 : f32
      %60 = vector.broadcast %cst_22 : f32 to vector<1x1xf32>
      %61 = arith.mulf %51, %60 : vector<1x1xf32>
      %cst_23 = arith.constant 1.250000e-01 : f32
      %62 = vector.broadcast %cst_23 : f32 to vector<1x16xf32>
      %63 = arith.mulf %59, %62 : vector<1x16xf32>
      %cst_24 = arith.constant 9.99999993E-9 : f32
      %64 = vector.broadcast %cst_24 : f32 to vector<1x16xf32>
      %65 = arith.maximumf %63, %64 : vector<1x16xf32>
      %66 = math.log %65 : vector<1x16xf32>
      %67 = arith.mulf %65, %66 : vector<1x16xf32>
      %cst_25 = arith.constant dense<0.000000e+00> : vector<1xf32>
      %68 = vector.multi_reduction <add>, %67, %cst_25 [1] : vector<1x16xf32> to vector<1xf32>
      %69 = vector.shape_cast %68 : vector<1xf32> to vector<1x1xf32>
      %cst_26 = arith.constant 0.000000e+00 : f32
      %70 = vector.broadcast %cst_26 : f32 to vector<1x1xf32>
      %71 = arith.subf %70, %69 : vector<1x1xf32>
      %cst_27 = arith.constant 2.000000e+00 : f32
      %72 = vector.broadcast %cst_27 : f32 to vector<1x1xf32>
      %73 = arith.mulf %72, %71 : vector<1x1xf32>
      %74 = arith.subf %61, %73 : vector<1x1xf32>
      %75 = tpu.iota {dimensions = array<i32: 1>} : vector<1x128xi32>
      %c0_i32_28 = arith.constant 0 : i32
      %76 = vector.broadcast %c0_i32_28 : i32 to vector<1x128xi32>
      %77 = arith.cmpi eq, %75, %76 : vector<1x128xi32>
      %c1_i32 = arith.constant 1 : i32
      %78 = vector.broadcast %c1_i32 : i32 to vector<1x128xi32>
      %79 = arith.cmpi eq, %75, %78 : vector<1x128xi32>
      %c2_i32 = arith.constant 2 : i32
      %80 = vector.broadcast %c2_i32 : i32 to vector<1x128xi32>
      %81 = arith.cmpi eq, %75, %80 : vector<1x128xi32>
      %cst_29 = arith.constant 0.000000e+00 : f32
      %82 = vector.shape_cast %71 : vector<1x1xf32> to vector<1x1xf32>
      %83 = vector.broadcast %82 : vector<1x1xf32> to vector<1x128xf32>
      %84 = vector.broadcast %cst_29 : f32 to vector<1x128xf32>
      %85 = arith.select %81, %83, %84 : vector<1x128xi1>, vector<1x128xf32>
      %86 = vector.shape_cast %61 : vector<1x1xf32> to vector<1x1xf32>
      %87 = vector.broadcast %86 : vector<1x1xf32> to vector<1x128xf32>
      %88 = arith.select %79, %87, %85 : vector<1x128xi1>, vector<1x128xf32>
      %89 = vector.shape_cast %74 : vector<1x1xf32> to vector<1x1xf32>
      %90 = vector.broadcast %89 : vector<1x1xf32> to vector<1x128xf32>
      %91 = arith.select %77, %90, %88 : vector<1x128xi1>, vector<1x128xf32>
      %c0_30 = arith.constant 0 : index
      %c0_31 = arith.constant 0 : index
      %92 = vector.load %arg3[%c0_30, %c0_31] : memref<1x128xf32, #tpu.memory_space<vmem>>, vector<1x128xf32>
      tpu.vector_store %arg3[%c0_30, %c0_31], %91 {strides = array<i32>} : memref<1x128xf32, #tpu.memory_space<vmem>>, vector<1x128xf32>,
    } else {
    }
    return
  }
  func.func @transform_0(%arg0: i32) -> (i32, i32) {
    %c0_i32 = arith.constant 0 : i32
    %c0_i32_0 = arith.constant 0 : i32
    return %arg0, %c0_i32 : i32, i32
  }
  func.func @transform_1(%arg0: i32) -> (i32, i32) {
    %c0_i32 = arith.constant 0 : i32
    %c0_i32_0 = arith.constant 0 : i32
    return %arg0, %c0_i32 : i32, i32
  }
  func.func @transform_2(%arg0: i32) -> (i32, i32) {
    %c0_i32 = arith.constant 0 : i32
    %c0_i32_0 = arith.constant 0 : i32
    %c0_i32_1 = arith.constant 0 : i32
    return %c0_i32, %c0_i32_0 : i32, i32
  }
}

</mosaic_0001>

<llo_original>
// kernel: tpu_custom_call.1
$region0: #{tpu_custom_call.1}
  #allocation0 [shape = 'u32[]', space=smem, size = 0x4, offset = 0x4, fixed_abs, tag = 'smem constant byte address 0x4 - core index']
  #allocation1 [shape = 'u32[144,128]{1,0:T(1,128)}', space=vmem, size = 0x12000, scoped, tag = 'internal scratch']
  #allocation2 [shape = 'f32[1,16]{1,0:T(1,128)}', space=vmem, size = 0x200, scoped, tag = 'scratch operand']
  #allocation3 [shape = 'f32[1,1]{1,0:T(1,128)}', space=vmem, size = 0x200, scoped, tag = 'scratch operand']
  %s0 = inlined_call_operand.hbm [shape: f32[16,16], index: 0, kind: input, shape index: {}]
  %s1 = inlined_call_operand.hbm [shape: f32[16,16], index: 1, kind: input, shape index: {}]
  %s2 = inlined_call_operand.hbm [shape: f32[1,128], index: 2, kind: output, shape index: {}]
  %s3 = sld [smem:[#allocation0]]
  $region38: #{tpu_custom_call.1} parent=0
    _
  %s5 = ssub.s32 1, %s3
  %s6 = scalar_select 0, %s5, %s3
  $region1: #{tpu_custom_call.1} parent=0
    #allocation4 [shape = 'u8[8192]{0}', space=vmem, size = 0x2000, scoped, tag = 'input window, operand 0, single buffered']
    #allocation5 [shape = 's32[1]{0}', space=sflag, size = 0x4, scoped, tag = 'scoped memory for tpu_custom_call.1']
    #allocation6 [shape = 's32[1]{0}', space=sflag, size = 0x4, scoped, tag = 'scoped memory for tpu_custom_call.1']
    #allocation7 [shape = 'u8[8192]{0}', space=vmem, size = 0x2000, scoped, tag = 'input window, operand 1, single buffered']
    #allocation8 [shape = 's32[1]{0}', space=sflag, size = 0x4, scoped, tag = 'scoped memory for tpu_custom_call.1']
    #allocation9 [shape = 'u8[512]{0}', space=vmem, size = 0x400, scoped, tag = 'output window, operand 0, single buffered']
    %7 = vsyncpa [#allocation5], 0
    %8 = vsyncpa [#allocation8], 0
    %9 = vsyncpa [#allocation6], 0
    // Predicated region
    $region2: #{tpu_custom_call.1} parent=1 // pred_check
      _
    $region3: #{tpu_custom_call.1} parent=1 // pred_check_branch
      %11 = sbr.rel (0) target = $region5
    $region4: #{tpu_custom_call.1} parent=1 // pred_region
      %s13 = ssub.s32 256, 256
      %14 = vsyncadd [#allocation5], %s13
      %s15 = sshll.u32 [#allocation4], 4
      %s16 = int_to_ptr.vmem [resolvable:$true] %s15
      %21 = dma.hbm_to_vmem [thread:$0]  %s0, 256, %s16, [#allocation5], 128, 128, 8
    $region5: #{tpu_custom_call.1} parent=1 // pred_fallthru
      _
    // Predicated region
    $region6: #{tpu_custom_call.1} parent=1 // pred_check
      _
    $region7: #{tpu_custom_call.1} parent=1 // pred_check_branch
      %23 = sbr.rel (0) target = $region9
    $region8: #{tpu_custom_call.1} parent=1 // pred_region
      %s25 = ssub.s32 256, 256
      %26 = vsyncadd [#allocation8], %s25
      %s27 = sshll.u32 [#allocation7], 4
      %s28 = int_to_ptr.vmem [resolvable:$true] %s27
      %33 = dma.hbm_to_vmem [thread:$0]  %s1, 256, %s28, [#allocation8], 128, 128, 8
    $region9: #{tpu_custom_call.1} parent=1 // pred_fallthru
      _
    // Predicated region
    $region10: #{tpu_custom_call.1} parent=1 // pred_check
      _
    $region11: #{tpu_custom_call.1} parent=1 // pred_check_branch
      %35 = sbr.rel (0) target = $region13
    $region12: #{tpu_custom_call.1} parent=1 // pred_region
      %36 = dma.done [#allocation5], 256
    $region13: #{tpu_custom_call.1} parent=1 // pred_fallthru
      _
    // Predicated region
    $region14: #{tpu_custom_call.1} parent=1 // pred_check
      _
    $region15: #{tpu_custom_call.1} parent=1 // pred_check_branch
      %38 = sbr.rel (0) target = $region17
    $region16: #{tpu_custom_call.1} parent=1 // pred_region
      %39 = dma.done [#allocation8], 256
    $region17: #{tpu_custom_call.1} parent=1 // pred_fallthru
      _
    %p40 = scmp.eq.s32.totalorder 0, 0
    // Predicated region
    $region18: #{tpu_custom_call.1} parent=1 // pred_check
      %p41 = pneg %p40
    $region19: #{tpu_custom_call.1} parent=1 // pred_check_branch
      %43 = sbr.rel (%p41) target = $region21
    $region20: #{tpu_custom_call.1} parent=1 // pred_region
      %vm44 = vcmask 122880
      %45 = vst.msk [vmem:[#allocation2] sm:$0x1] %vm44, 0.0
      %vm46 = vcmask 0
      %47 = vst.msk [vmem:[#allocation3] sm:$0x1] %vm46, 0.0
    $region21: #{tpu_custom_call.1} parent=1 // pred_fallthru
      _
    %v48 = vld [vmem:[#allocation4] sm:$0xff]
    %v49 = vld [vmem:[#allocation4 + $0x8] sm:$0xff]
    %v50 = vld [vmem:[#allocation7] sm:$0xff]
    %v51 = vld [vmem:[#allocation7 + $0x8] sm:$0xff]
    %vm52 = vcmask 130048
    %v53 = vsel %vm52, %v48, -inf
    %54 = vmax.xlane.f32.xlu0 %v53
    %v55 = vpop.xlane.xlu0 %54
    %v56 = vsel %vm52, %v49, -inf
    %57 = vmax.xlane.f32.xlu0 %v56
    %v58 = vpop.xlane.xlu0 %57
    %v59 = vsub.f32 %v48, %v55
    %v60 = vsub.f32 %v49, %v58
    %v61 = vmul.f32 %v59, 1.442695
    %v62 = vpow.pop %v61
    %v63 = vmul.f32 %v60, 1.442695
    %v64 = vpow.pop %v63
    %v65 = vsel %vm52, %v62, 0.0
    %66 = vadd.xlane.f32.xlu0 %v65
    %v67 = vpop.xlane.xlu0 %66
    %v68 = vsel %vm52, %v64, 0.0
    %69 = vadd.xlane.f32.xlu0 %v68
    %v70 = vpop.xlane.xlu0 %69
    %v71 = vsel %vm52, %v50, -inf
    %72 = vmax.xlane.f32.xlu0 %v71
    %v73 = vpop.xlane.xlu0 %72
    %v74 = vsel %vm52, %v51, -inf
    %75 = vmax.xlane.f32.xlu0 %v74
    %v76 = vpop.xlane.xlu0 %75
    %v77 = vsub.f32 %v50, %v73
    %v78 = vsub.f32 %v51, %v76
    %v79 = vmul.f32 %v77, 1.442695
    %v80 = vpow.pop %v79
    %v81 = vmul.f32 %v78, 1.442695
    %v82 = vpow.pop %v81
    %v83 = vsel %vm52, %v80, 0.0
    %84 = vadd.xlane.f32.xlu0 %v83
    %v85 = vpop.xlane.xlu0 %84
    %v86 = vsel %vm52, %v82, 0.0
    %87 = vadd.xlane.f32.xlu0 %v86
    %v88 = vpop.xlane.xlu0 %87
    %v89 = vrcp.pop %v67
    %v90 = vrcp.pop %v70
    %v91 = vmul.f32 %v62, %v89
    %v92 = vmul.f32 %v64, %v90
    %v93 = vmul.f32 %v62, %v80
    %v94 = vmul.f32 %v64, %v82
    %v95 = vsel %vm52, %v93, 0.0
    %96 = vadd.xlane.f32.xlu0 %v95
    %v97 = vpop.xlane.xlu0 %96
    %v98 = vsel %vm52, %v94, 0.0
    %99 = vadd.xlane.f32.xlu0 %v98
    %v100 = vpop.xlane.xlu0 %99
    %v101 = vlog2.pop %v97
    %v102 = vmul.f32 %v101, 0.6931472
    %v103 = vlog2.pop %v100
    %v104 = vmul.f32 %v103, 0.6931472
    %v105 = vlog2.pop %v67
    %v106 = vmul.f32 %v105, 0.6931472
    %v107 = vlog2.pop %v70
    %v108 = vmul.f32 %v107, 0.6931472
    %v109 = vsub.f32 %v102, %v106
    %v110 = vsub.f32 %v104, %v108
    %v111 = vlog2.pop %v85
    %v112 = vmul.f32 %v111, 0.6931472
    %v113 = vlog2.pop %v88
    %v114 = vmul.f32 %v113, 0.6931472
    %v115 = vsub.f32 %v109, %v112
    %v116 = vsub.f32 %v110, %v114
    %v117 = vmax.f32 %v115, -100.0
    %v118 = vmax.f32 %v116, -100.0
    %v119 = vsub.f32 0.0, %v117
    %v120 = vsub.f32 0.0, %v118
    %p121 = scmp.ne.s32.totalorder 0, 0
    // Predicated region
    $region22: #{tpu_custom_call.1} parent=1 // pred_check
      %p122 = pneg %p121
    $region23: #{tpu_custom_call.1} parent=1 // pred_check_branch
      %124 = sbr.rel (%p122) target = $region25
    $region24: #{tpu_custom_call.1} parent=1 // pred_region
      %v125 = vld [vmem:[#allocation3] sm:$0x1]
      %v126 = vadd.f32 %v119, %v120
      %v127 = vrot.slane %v126, 4
      %v128 = vadd.f32 %v126, %v127
      %v129 = vrot.slane %v128, 2
      %v130 = vadd.f32 %v128, %v129
      %v131 = vrot.slane %v130, 1
      %v132 = vadd.f32 %v130, %v131
      %v133 = vadd.f32 %v125, %v132
      %vm134 = vcmask 0
      %135 = vst.msk [vmem:[#allocation3] sm:$0x1] %vm134, %v133
      %v136 = vld [vmem:[#allocation2] sm:$0x1]
      %v137 = vsel %vm52, %v91, 0.0
      %v138 = vsel %vm52, %v92, 0.0
      %v139 = vadd.f32 %v137, %v138
      %v140 = vrot.slane %v139, 4
      %v141 = vadd.f32 %v139, %v140
      %v142 = vrot.slane %v141, 2
      %v143 = vadd.f32 %v141, %v142
      %v144 = vrot.slane %v143, 1
      %v145 = vadd.f32 %v143, %v144
      %v146 = vadd.f32 %v136, %v145
      %vm147 = vcmask 122880
      %148 = vst.msk [vmem:[#allocation2] sm:$0x1] %vm147, %v146
    $region25: #{tpu_custom_call.1} parent=1 // pred_fallthru
      _
    // Predicated region
    $region26: #{tpu_custom_call.1} parent=1 // pred_check
      %p149 = pneg %p40
    $region27: #{tpu_custom_call.1} parent=1 // pred_check_branch
      %151 = sbr.rel (%p149) target = $region29
    $region28: #{tpu_custom_call.1} parent=1 // pred_region
      %v152 = vlaneseq
      %v153 = vshrl.u32 %v152, 7
      %v154 = vadd.s32 %v153, 8
      %s155 = smul.u32 0, 16
      %v156 = vstv %s155
      %v157 = vadd.s32 %v156, %v153
      %v158 = vadd.s32 %v156, %v154
      %vm159 = vcmp.lt.s32.totalorder %v157, 8
      %vm160 = vcmp.lt.s32.totalorder %v158, 8
      %v161 = vld [vmem:[#allocation3] sm:$0x1]
      %v162 = vsel %vm159, %v119, 0.0
      %v163 = vsel %vm160, %v120, 0.0
      %v164 = vadd.f32 %v162, %v163
      %v165 = vrot.slane %v164, 4
      %v166 = vadd.f32 %v164, %v165
      %v167 = vrot.slane %v166, 2
      %v168 = vadd.f32 %v166, %v167
      %v169 = vrot.slane %v168, 1
      %v170 = vadd.f32 %v168, %v169
      %v171 = vadd.f32 %v161, %v170
      %v172 = vld [vmem:[#allocation2] sm:$0x1]
      %v173 = vsel %vm159, 1, 0
      %v174 = vsel %vm160, 1, 0
      %vm175 = vcmp.eq.s32.totalorder %v173, 1
      %vm176 = vcmp.eq.s32.totalorder %v174, 1
      %v177 = vsel %vm175, %v91, 0.0
      %v178 = vsel %vm176, %v92, 0.0
      %v179 = vsel %vm52, %v177, 0.0
      %v180 = vsel %vm52, %v178, 0.0
      %v181 = vadd.f32 %v179, %v180
      %v182 = vrot.slane %v181, 4
      %v183 = vadd.f32 %v181, %v182
      %v184 = vrot.slane %v183, 2
      %v185 = vadd.f32 %v183, %v184
      %v186 = vrot.slane %v185, 1
      %v187 = vadd.f32 %v185, %v186
      %v188 = vadd.f32 %v172, %v187
      %v189 = vmul.f32 %v171, 0.125
      %v190 = vmul.f32 %v188, 0.125
      %v191 = vmax.f32 %v190, 1e-08
      %v192 = vlog2.pop %v191
      %v193 = vmul.f32 %v192, 0.6931472
      %v194 = vmul.f32 %v191, %v193
      %vm195 = vcmask 122880
      %v196 = vsel %vm195, %v194, 0.0
      %197 = vadd.xlane.f32.xlu0 %v196
      %v198 = vpop.xlane.xlu0 %197
      %v199 = vsub.f32 0.0, %v198
      %v200 = vmul.f32 %v199, 2.0
      %v201 = vsub.f32 %v189, %v200
      %v202 = vlaneseq
      %v203 = vand.u32 %v202, 127
      %vm204 = vcmp.eq.s32.totalorder %v203, 0
      %vm205 = vcmp.eq.s32.totalorder %v203, 1
      %vm206 = vcmp.eq.s32.totalorder %v203, 2
      %v207 = vsel %vm206, %v199, 0.0
      %209 = vset.pattern.permute.xlu0 0
      %210 = vperm.xlu0 %209, %v189
      %v211 = vpop.permute.xlu0 %210
      %v213 = vlaneseq
      %v214 = vshrl.u32 %v213, 7
      %v215 = vsub.s32 0, %v214
      %v216 = vrot.slane %v211, %v215
      %v217 = vsel %vm205, %v216, %v207
      %219 = vset.pattern.permute.xlu0 0
      %220 = vperm.xlu0 %219, %v201
      %v221 = vpop.permute.xlu0 %220
      %v223 = vlaneseq
      %v224 = vshrl.u32 %v223, 7
      %v225 = vsub.s32 0, %v224
      %v226 = vrot.slane %v221, %v225
      %v227 = vsel %vm204, %v226, %v217
      %228 = vst [vmem:[#allocation9] sm:$0x1] %v227
    $region29: #{tpu_custom_call.1} parent=1 // pred_fallthru
      _
    // Predicated region
    $region30: #{tpu_custom_call.1} parent=1 // pred_check
      _
    $region31: #{tpu_custom_call.1} parent=1 // pred_check_branch
      %230 = sbr.rel (0) target = $region33
    $region32: #{tpu_custom_call.1} parent=1 // pred_region
      %s232 = ssub.s32 16, 16
      %233 = vsyncadd [#allocation6], %s232
      %s235 = sshll.u32 [#allocation9], 4
      %s236 = int_to_ptr.vmem [resolvable:$true] %s235
      %238 = dma.vmem_to_hbm [thread:$0]  %s236, 16, %s2, [#allocation6]
    $region33: #{tpu_custom_call.1} parent=1 // pred_fallthru
      _
    // Predicated region
    $region34: #{tpu_custom_call.1} parent=1 // pred_check
      _
    $region35: #{tpu_custom_call.1} parent=1 // pred_check_branch
      %240 = sbr.rel (0) target = $region37
    $region36: #{tpu_custom_call.1} parent=1 // pred_region
      %241 = dma.done [#allocation6], 16
    $region37: #{tpu_custom_call.1} parent=1 // pred_fallthru
      _
    %242 = vsyncpa [#allocation5], 1
    %243 = vsyncpa [#allocation8], 1
    %244 = vsyncpa [#allocation6], 1

</llo_original>
